<compile_context>
chip_gen: v5e
topology: v5e:2x2
jax: 0.10.0
libtpu: 0.0.40
codegen_flags: <defaults>
</compile_context>

<pallas_src>
import math
import jax
import jax.numpy as jnp
from jax.experimental import pallas as pl
from jax.experimental.pallas import tpu as pltpu

INPUT_SIZE = 32
HIDDEN_SIZES = [64, 64, 32, 32]
BN_EPS = 1e-5
BATCH = 16            # small latency-path test batch
BATCH2 = 200          # ragged multi-step test batch (padding + 2 parallel steps)
LANES = 128           # packed activation width (two 64-wide halves)

# Row offsets of the (block-diagonally doubled) weight blocks in the slab.
ROW_W0 = 0            # [64, 128]   Linear(32,64)  x2 halves
ROW_W1 = 64           # [128, 128]  Linear(64,64)
ROW_W2 = 192          # [128, 128]  Linear(64,64)
ROW_W3 = 320          # [128, 128]  merged skip Linear(64,32) + main Linear(64,32)
ROW_W4 = 448          # [128, 128]  Linear(32,32) (reads upper half-lanes)
ROW_W5 = 576          # [128, 128]  Linear(32,32)
ROW_BIAS = 704        # [8, 128]    bias rows 0..5, row 6 = final bias b6
ROW_FIN = 712         # [8, 128]    rows 0/1 = final Linear(32,1) lane selectors
SLAB_ROWS = 720

MAX_TILE_P = 128      # packed rows per grid step (= 256 batch rows)
SINGLE_STEP_P = 64    # up to this many packed rows (128 batch rows) -> 1 step


def _gelu(x):
    # nn.GELU() default = exact (erf-based) GELU.  tanh-approx would move the
    # chain to the EUP but changes numerics vs PyTorch, so it is not used.
    return 0.5 * x * (1.0 + jax.lax.erf(x * (1.0 / math.sqrt(2.0))))


def _round8(v):
    return ((v + 7) // 8) * 8


# ----------------------------- kernel ---------------------------------------


def melody_net_kernel(x_ref, p_ref, out_ref):
    x = x_ref[...]                                  # [TP, 64]  lane-packed pair of rows
    bb = p_ref[ROW_BIAS:ROW_BIAS + 8, :]            # [8, 128]  bias / scalar rows

    def fused(h, row, rows, brow):
        # Linear + (host-folded) BatchNorm + exact GELU.  Dropout = identity (eval).
        z = jnp.dot(h, p_ref[row:row + rows, :], preferred_element_type=jnp.float32)
        return _gelu(z + bb[brow:brow + 1, :])

    # input_layer: Linear(32,64) + BN + GELU            -> [TP, 128]
    h = fused(x, ROW_W0, 64, 0)

    # ResidualBlock(64, 64): identity skip
    a = fused(h, ROW_W1, 128, 1)
    c = fused(a, ROW_W2, 128, 2)
    h = c + h

    # ResidualBlock(64, 32): linear skip.  Skip Linear and the first main
    # Linear share ONE MXU pass (per half: lanes 0:32 = skip, 32:64 = main).
    z = jnp.dot(h, p_ref[ROW_W3:ROW_W3 + 128, :],
                preferred_element_type=jnp.float32) + bb[3:4, :]
    g = _gelu(z)                     # GELU on skip lanes is dead (zero W4 rows)
    c = fused(g, ROW_W4, 128, 4)     # per half: lanes 0:32 real, 32:64 exactly 0
    h = c + z                        # per half: 0:32 = main+skip; 32:64 finite junk,
                                     # killed next by the zero rows of the W5 block.

    # final hidden: Linear(32,32) + BN + GELU (zero-padded lanes stay exactly 0)
    y = fused(h, ROW_W5, 128, 5)

    # final Linear(32,1) + Sigmoid computed against y^T so batch lands on lanes:
    # selector rows 0/1 pick half-A / half-B hidden features -> [8, TP] logits
    # (rows 2..7 are dead) and the store is a single lane-dense write.
    logits = jnp.dot(p_ref[ROW_FIN:ROW_FIN + 8, :], y.T,
                     preferred_element_type=jnp.float32) + bb[6:7, 0:1]
    out_ref[0] = jax.nn.sigmoid(logits).astype(out_ref.dtype)


# ----------------------------- wrapper ---------------------------------------


def binary_melody_net(x, param_slab):
    B = x.shape[0]
    assert x.shape[1] == INPUT_SIZE

    # Tile selection over PACKED rows (1 packed row = 2 batch rows).
    pb_need = (B + 1) // 2
    if pb_need <= SINGLE_STEP_P:
        tile_p = max(8, _round8(pb_need))            # tiny batch: one latency-optimal step
        grid_len = 1
    else:
        # >= 2 "parallel" steps so v7x's two TensorCores both get work;
        # capped at 128 packed rows to keep the live set near the vreg budget.
        tile_p = min(MAX_TILE_P, _round8(-(-pb_need // 2)))
        grid_len = -(-pb_need // tile_p)
    pb = grid_len * tile_p
    Bp = 2 * pb

    # Host-side zero padding + lane packing: row 2i -> lanes 0:32, 2i+1 -> 32:64.
    xp = jnp.zeros((Bp, INPUT_SIZE), jnp.float32).at[:B].set(x.astype(jnp.float32))
    xp = xp.reshape(pb, 2 * INPUT_SIZE)

    flops = 2 * pb * 128 * (64 + 5 * 128 + 8)
    cost = pl.CostEstimate(
        flops=int(flops),
        transcendentals=int(6 * pb * 128 + 8 * pb),
        bytes_accessed=int(xp.size * 4 + param_slab.size * 4 + grid_len * 8 * tile_p * 4),
    )

    out = pl.pallas_call(
        melody_net_kernel,
        out_shape=jax.ShapeDtypeStruct((grid_len, 8, tile_p), jnp.float32),
        grid=(grid_len,),
        in_specs=[
            pl.BlockSpec((tile_p, 2 * INPUT_SIZE), lambda i: (i, 0)),
            # Whole parameter slab; constant index_map => fetched once for the grid.
            pl.BlockSpec((SLAB_ROWS, LANES), lambda i: (0, 0)),
        ],
        out_specs=pl.BlockSpec((1, 8, tile_p), lambda i: (i, 0, 0)),
        compiler_params=pltpu.CompilerParams(
            dimension_semantics=("parallel",) if grid_len > 1 else ("arbitrary",),
        ),
        cost_estimate=cost,
    )(xp, param_slab)

    # Rows 0/1 carry the two lane-packed halves; unpack and drop batch padding.
    return out[:, 0:2, :].transpose(0, 2, 1).reshape(Bp, 1)[:B]


# --------------------- parameter init / packing ------------------------------


def init_raw_params(key):
    """Deterministic init matching _init_weights.

    Linear: kaiming_normal_(fan_out, relu) -> std = sqrt(2/out), bias = 0.
    BatchNorm1d (eval): gamma=1, beta=0, running_mean=0, running_var=1
      -> scale = 1/sqrt(1+eps), shift = 0.
    Weights are returned in [in, out] layout (PyTorch [out, in] transposed).
    """

    def linear(k, fan_in, fan_out):
        std = math.sqrt(2.0 / fan_out)
        w_pt = std * jax.random.normal(k, (fan_out, fan_in), dtype=jnp.float32)
        return w_pt.T, jnp.zeros((fan_out,), jnp.float32)

    def bn(fan_out):
        scale = jnp.full((fan_out,), 1.0 / math.sqrt(1.0 + BN_EPS), jnp.float32)
        shift = jnp.zeros((fan_out,), jnp.float32)
        return scale, shift

    keys = jax.random.split(key, 8)
    h = HIDDEN_SIZES
    w0, b0 = linear(keys[0], INPUT_SIZE, h[0]); s0, t0 = bn(h[0])
    w1, b1 = linear(keys[1], h[0], h[1]);       s1, t1 = bn(h[1])
    w2, b2 = linear(keys[2], h[1], h[1]);       s2, t2 = bn(h[1])
    w3, b3 = linear(keys[3], h[1], h[2]);       s3, t3 = bn(h[2])
    w4, b4 = linear(keys[4], h[2], h[2]);       s4, t4 = bn(h[2])
    wsk, bsk = linear(keys[5], h[1], h[2])
    w5, b5 = linear(keys[6], h[2], h[3]);       s5, t5 = bn(h[3])
    w6, b6 = linear(keys[7], h[3], 1)
    return (w0, b0, s0, t0, w1, b1, s1, t1, w2, b2, s2, t2,
            w3, b3, s3, t3, w4, b4, s4, t4, wsk, bsk,
            w5, b5, s5, t5, w6, b6)


def pack_params(raw):
    """Fold BN+bias into the weights and pack everything into one [720,128] slab.

    Every per-half (64-lane) block is duplicated block-diagonally so the two
    lane-packed batch rows are processed by the same MXU pass without cross-talk.
    NOTE: bakes in whatever BN running stats are in `raw` (eval semantics).
    """
    (w0, b0, s0, t0, w1, b1, s1, t1, w2, b2, s2, t2,
     w3, b3, s3, t3, w4, b4, s4, t4, wsk, bsk,
     w5, b5, s5, t5, w6, b6) = raw

    def fold(w, b, s, t):
        return w * s[None, :], b * s + t

    w0f, b0f = fold(w0, b0, s0, t0)
    w1f, b1f = fold(w1, b1, s1, t1)
    w2f, b2f = fold(w2, b2, s2, t2)
    w3f, b3f = fold(w3, b3, s3, t3)
    w4f, b4f = fold(w4, b4, s4, t4)
    w5f, b5f = fold(w5, b5, s5, t5)

    z32 = jnp.zeros((32,), jnp.float32)
    # Per-half (64-lane) weight blocks.
    blk0 = w0f                                                        # [32, 64]
    blk1 = w1f                                                        # [64, 64]
    blk2 = w2f                                                        # [64, 64]
    blk3 = jnp.zeros((64, 64), jnp.float32).at[:, 0:32].set(wsk).at[:, 32:64].set(w3f)
    blk4 = jnp.zeros((64, 64), jnp.float32).at[32:64, 0:32].set(w4f)
    blk5 = jnp.zeros((64, 64), jnp.float32).at[0:32, 0:32].set(w5f)
    # Per-half bias rows.
    bias_rows = [b0f, b1f, b2f,
                 jnp.concatenate([bsk, b3f]),
                 jnp.concatenate([b4f, z32]),
                 jnp.concatenate([b5f, z32])]
    wfin_half = jnp.concatenate([w6[:, 0], z32])                      # [64]

    slab = jnp.zeros((SLAB_ROWS, LANES), jnp.float32)

    def put2(s, row, blk):
        r = blk.shape[0]
        s = s.at[row:row + r, 0:64].set(blk)
        return s.at[row + r:row + 2 * r, 64:128].set(blk)

    slab = put2(slab, ROW_W0, blk0)
    slab = put2(slab, ROW_W1, blk1)
    slab = put2(slab, ROW_W2, blk2)
    slab = put2(slab, ROW_W3, blk3)
    slab = put2(slab, ROW_W4, blk4)
    slab = put2(slab, ROW_W5, blk5)
    for i, r in enumerate(bias_rows):
        slab = slab.at[ROW_BIAS + i, 0:64].set(r)
        slab = slab.at[ROW_BIAS + i, 64:128].set(r)
    slab = slab.at[ROW_BIAS + 6, :].set(jnp.full((LANES,), b6[0], jnp.float32))
    # Final-layer lane selectors (half A in row 0, half B in row 1).
    slab = slab.at[ROW_FIN + 0, 0:64].set(wfin_half)
    slab = slab.at[ROW_FIN + 1, 64:128].set(wfin_half)
    return slab


# ----------------------------- reference -------------------------------------


def _reference(x, raw):
    """Plain-JAX forward using the UNfolded parameters (checks fold + kernel)."""
    (w0, b0, s0, t0, w1, b1, s1, t1, w2, b2, s2, t2,
     w3, b3, s3, t3, w4, b4, s4, t4, wsk, bsk,
     w5, b5, s5, t5, w6, b6) = raw

    def lbg(x, w, b, s, t):
        return _gelu((x @ w + b) * s + t)

    h = lbg(x, w0, b0, s0, t0)
    h = lbg(lbg(h, w1, b1, s1, t1), w2, b2, s2, t2) + h
    h = lbg(lbg(h, w3, b3, s3, t3), w4, b4, s4, t4) + (h @ wsk + bsk)
    y = lbg(h, w5, b5, s5, t5)
    return jax.nn.sigmoid(y @ w6 + b6)


if __name__ == "__main__":
    key = jax.random.PRNGKey(0)
    k_param, k_x, k_x2 = jax.random.split(key, 3)

    raw_params = init_raw_params(k_param)
    param_slab = pack_params(raw_params)

    # Small latency-path batch: single grid step.
    x = jax.random.normal(k_x, (BATCH, INPUT_SIZE), dtype=jnp.float32)
    out = jax.block_until_ready(binary_melody_net(x, param_slab))
    ref = _reference(x, raw_params)
    assert out.shape == (BATCH, 1)
    assert jnp.allclose(out, ref, atol=2e-5, rtol=2e-5), "mismatch vs JAX reference (B=16)"

    # Ragged batch: exercises zero padding + 2 "parallel" grid steps.
    x2 = jax.random.normal(k_x2, (BATCH2, INPUT_SIZE), dtype=jnp.float32)
    out2 = jax.block_until_ready(binary_melody_net(x2, param_slab))
    ref2 = _reference(x2, raw_params)
    assert out2.shape == (BATCH2, 1)
    assert jnp.allclose(out2, ref2, atol=2e-5, rtol=2e-5), "mismatch vs JAX reference (B=200)"

    print("KERNEL_OK")
</pallas_src>

<mosaic_0001>
module attributes {stable_mosaic.version = 11 : i64} {
  func.func @melody_net_kernel(%arg0: i32, %arg1: memref<8x64xf32, #tpu.memory_space<vmem>>, %arg2: memref<720x128xf32, #tpu.memory_space<vmem>>, %arg3: memref<1x8x8xf32, #tpu.memory_space<vmem>>) attributes {dimension_semantics = [#tpu.dimension_semantics<arbitrary>], iteration_bounds = array<i64: 1>, scalar_prefetch = 0 : i64, scratch_operands = 0 : i64, tpu.core_type = #tpu.core_type<tc>, window_params = [{transform_indices = @transform_0, window_bounds = array<i64: 8, 64>}, {pipeline_mode = #tpu.pipeline_mode<synchronous>, transform_indices = @transform_1, window_bounds = array<i64: 720, 128>}, {transform_indices = @transform_2, window_bounds = array<i64: 1, 8, 8>}]} {
    %c0 = arith.constant 0 : index
    %c0_0 = arith.constant 0 : index
    %0 = vector.load %arg1[%c0, %c0_0] : memref<8x64xf32, #tpu.memory_space<vmem>>, vector<8x64xf32>
    %c704 = arith.constant 704 : index
    %c0_1 = arith.constant 0 : index
    %1 = vector.load %arg2[%c704, %c0_1] : memref<720x128xf32, #tpu.memory_space<vmem>>, vector<8x128xf32>
    %c0_2 = arith.constant 0 : index
    %c0_3 = arith.constant 0 : index
    %2 = vector.load %arg2[%c0_2, %c0_3] : memref<720x128xf32, #tpu.memory_space<vmem>>, vector<64x128xf32>
    %cst = arith.constant dense<0.000000e+00> : vector<8x128xf32>
    %3 = tpu.matmul %0, %2, %cst {dimension_numbers = #tpu.dot_dimension_numbers<[1], [0], [0], [1], [0, 0, 1, 1], [], []>} : vector<8x64xf32>, vector<64x128xf32>, vector<8x128xf32> -> vector<8x128xf32>
    %4 = vector.extract_strided_slice %1 {offsets = [0, 0], sizes = [1, 128], strides = [1, 1]} : vector<8x128xf32> to vector<1x128xf32>
    %5 = vector.broadcast %4 : vector<1x128xf32> to vector<8x128xf32>
    %6 = arith.addf %3, %5 : vector<8x128xf32>
    %cst_4 = arith.constant 5.000000e-01 : f32
    %7 = vector.broadcast %cst_4 : f32 to vector<8x128xf32>
    %8 = arith.mulf %7, %6 : vector<8x128xf32>
    %cst_5 = arith.constant 0.707106769 : f32
    %9 = vector.broadcast %cst_5 : f32 to vector<8x128xf32>
    %10 = arith.mulf %6, %9 : vector<8x128xf32>
    %11 = math.erf %10 : vector<8x128xf32>
    %cst_6 = arith.constant 1.000000e+00 : f32
    %12 = vector.broadcast %cst_6 : f32 to vector<8x128xf32>
    %13 = arith.addf %12, %11 : vector<8x128xf32>
    %14 = arith.mulf %8, %13 : vector<8x128xf32>
    %c64 = arith.constant 64 : index
    %c0_7 = arith.constant 0 : index
    %15 = vector.load %arg2[%c64, %c0_7] : memref<720x128xf32, #tpu.memory_space<vmem>>, vector<128x128xf32>
    %cst_8 = arith.constant dense<0.000000e+00> : vector<8x128xf32>
    %16 = tpu.matmul %14, %15, %cst_8 {dimension_numbers = #tpu.dot_dimension_numbers<[1], [0], [0], [1], [0, 0, 1, 1], [], []>} : vector<8x128xf32>, vector<128x128xf32>, vector<8x128xf32> -> vector<8x128xf32>
    %17 = vector.extract_strided_slice %1 {offsets = [1, 0], sizes = [1, 128], strides = [1, 1]} : vector<8x128xf32> to vector<1x128xf32>
    %18 = vector.broadcast %17 : vector<1x128xf32> to vector<8x128xf32>
    %19 = arith.addf %16, %18 : vector<8x128xf32>
    %cst_9 = arith.constant 5.000000e-01 : f32
    %20 = vector.broadcast %cst_9 : f32 to vector<8x128xf32>
    %21 = arith.mulf %20, %19 : vector<8x128xf32>
    %cst_10 = arith.constant 0.707106769 : f32
    %22 = vector.broadcast %cst_10 : f32 to vector<8x128xf32>
    %23 = arith.mulf %19, %22 : vector<8x128xf32>
    %24 = math.erf %23 : vector<8x128xf32>
    %cst_11 = arith.constant 1.000000e+00 : f32
    %25 = vector.broadcast %cst_11 : f32 to vector<8x128xf32>
    %26 = arith.addf %25, %24 : vector<8x128xf32>
    %27 = arith.mulf %21, %26 : vector<8x128xf32>
    %c192 = arith.constant 192 : index
    %c0_12 = arith.constant 0 : index
    %28 = vector.load %arg2[%c192, %c0_12] : memref<720x128xf32, #tpu.memory_space<vmem>>, vector<128x128xf32>
    %cst_13 = arith.constant dense<0.000000e+00> : vector<8x128xf32>
    %29 = tpu.matmul %27, %28, %cst_13 {dimension_numbers = #tpu.dot_dimension_numbers<[1], [0], [0], [1], [0, 0, 1, 1], [], []>} : vector<8x128xf32>, vector<128x128xf32>, vector<8x128xf32> -> vector<8x128xf32>
    %30 = vector.extract_strided_slice %1 {offsets = [2, 0], sizes = [1, 128], strides = [1, 1]} : vector<8x128xf32> to vector<1x128xf32>
    %31 = vector.broadcast %30 : vector<1x128xf32> to vector<8x128xf32>
    %32 = arith.addf %29, %31 : vector<8x128xf32>
    %cst_14 = arith.constant 5.000000e-01 : f32
    %33 = vector.broadcast %cst_14 : f32 to vector<8x128xf32>
    %34 = arith.mulf %33, %32 : vector<8x128xf32>
    %cst_15 = arith.constant 0.707106769 : f32
    %35 = vector.broadcast %cst_15 : f32 to vector<8x128xf32>
    %36 = arith.mulf %32, %35 : vector<8x128xf32>
    %37 = math.erf %36 : vector<8x128xf32>
    %cst_16 = arith.constant 1.000000e+00 : f32
    %38 = vector.broadcast %cst_16 : f32 to vector<8x128xf32>
    %39 = arith.addf %38, %37 : vector<8x128xf32>
    %40 = arith.mulf %34, %39 : vector<8x128xf32>
    %41 = arith.addf %40, %14 : vector<8x128xf32>
    %c320 = arith.constant 320 : index
    %c0_17 = arith.constant 0 : index
    %42 = vector.load %arg2[%c320, %c0_17] : memref<720x128xf32, #tpu.memory_space<vmem>>, vector<128x128xf32>
    %cst_18 = arith.constant dense<0.000000e+00> : vector<8x128xf32>
    %43 = tpu.matmul %41, %42, %cst_18 {dimension_numbers = #tpu.dot_dimension_numbers<[1], [0], [0], [1], [0, 0, 1, 1], [], []>} : vector<8x128xf32>, vector<128x128xf32>, vector<8x128xf32> -> vector<8x128xf32>
    %44 = vector.extract_strided_slice %1 {offsets = [3, 0], sizes = [1, 128], strides = [1, 1]} : vector<8x128xf32> to vector<1x128xf32>
    %45 = vector.broadcast %44 : vector<1x128xf32> to vector<8x128xf32>
    %46 = arith.addf %43, %45 : vector<8x128xf32>
    %cst_19 = arith.constant 5.000000e-01 : f32
    %47 = vector.broadcast %cst_19 : f32 to vector<8x128xf32>
    %48 = arith.mulf %47, %46 : vector<8x128xf32>
    %cst_20 = arith.constant 0.707106769 : f32
    %49 = vector.broadcast %cst_20 : f32 to vector<8x128xf32>
    %50 = arith.mulf %46, %49 : vector<8x128xf32>
    %51 = math.erf %50 : vector<8x128xf32>
    %cst_21 = arith.constant 1.000000e+00 : f32
    %52 = vector.broadcast %cst_21 : f32 to vector<8x128xf32>
    %53 = arith.addf %52, %51 : vector<8x128xf32>
    %54 = arith.mulf %48, %53 : vector<8x128xf32>
    %c448 = arith.constant 448 : index
    %c0_22 = arith.constant 0 : index
    %55 = vector.load %arg2[%c448, %c0_22] : memref<720x128xf32, #tpu.memory_space<vmem>>, vector<128x128xf32>
    %cst_23 = arith.constant dense<0.000000e+00> : vector<8x128xf32>
    %56 = tpu.matmul %54, %55, %cst_23 {dimension_numbers = #tpu.dot_dimension_numbers<[1], [0], [0], [1], [0, 0, 1, 1], [], []>} : vector<8x128xf32>, vector<128x128xf32>, vector<8x128xf32> -> vector<8x128xf32>
    %57 = vector.extract_strided_slice %1 {offsets = [4, 0], sizes = [1, 128], strides = [1, 1]} : vector<8x128xf32> to vector<1x128xf32>
    %58 = vector.broadcast %57 : vector<1x128xf32> to vector<8x128xf32>
    %59 = arith.addf %56, %58 : vector<8x128xf32>
    %cst_24 = arith.constant 5.000000e-01 : f32
    %60 = vector.broadcast %cst_24 : f32 to vector<8x128xf32>
    %61 = arith.mulf %60, %59 : vector<8x128xf32>
    %cst_25 = arith.constant 0.707106769 : f32
    %62 = vector.broadcast %cst_25 : f32 to vector<8x128xf32>
    %63 = arith.mulf %59, %62 : vector<8x128xf32>
    %64 = math.erf %63 : vector<8x128xf32>
    %cst_26 = arith.constant 1.000000e+00 : f32
    %65 = vector.broadcast %cst_26 : f32 to vector<8x128xf32>
    %66 = arith.addf %65, %64 : vector<8x128xf32>
    %67 = arith.mulf %61, %66 : vector<8x128xf32>
    %68 = arith.addf %67, %46 : vector<8x128xf32>
    %c576 = arith.constant 576 : index
    %c0_27 = arith.constant 0 : index
    %69 = vector.load %arg2[%c576, %c0_27] : memref<720x128xf32, #tpu.memory_space<vmem>>, vector<128x128xf32>
    %cst_28 = arith.constant dense<0.000000e+00> : vector<8x128xf32>
    %70 = tpu.matmul %68, %69, %cst_28 {dimension_numbers = #tpu.dot_dimension_numbers<[1], [0], [0], [1], [0, 0, 1, 1], [], []>} : vector<8x128xf32>, vector<128x128xf32>, vector<8x128xf32> -> vector<8x128xf32>
    %71 = vector.extract_strided_slice %1 {offsets = [5, 0], sizes = [1, 128], strides = [1, 1]} : vector<8x128xf32> to vector<1x128xf32>
    %72 = vector.broadcast %71 : vector<1x128xf32> to vector<8x128xf32>
    %73 = arith.addf %70, %72 : vector<8x128xf32>
    %cst_29 = arith.constant 5.000000e-01 : f32
    %74 = vector.broadcast %cst_29 : f32 to vector<8x128xf32>
    %75 = arith.mulf %74, %73 : vector<8x128xf32>
    %cst_30 = arith.constant 0.707106769 : f32
    %76 = vector.broadcast %cst_30 : f32 to vector<8x128xf32>
    %77 = arith.mulf %73, %76 : vector<8x128xf32>
    %78 = math.erf %77 : vector<8x128xf32>
    %cst_31 = arith.constant 1.000000e+00 : f32
    %79 = vector.broadcast %cst_31 : f32 to vector<8x128xf32>
    %80 = arith.addf %79, %78 : vector<8x128xf32>
    %81 = arith.mulf %75, %80 : vector<8x128xf32>
    %c712 = arith.constant 712 : index
    %c0_32 = arith.constant 0 : index
    %82 = vector.load %arg2[%c712, %c0_32] : memref<720x128xf32, #tpu.memory_space<vmem>>, vector<8x128xf32>
    %83 = tpu.transpose %81, [1, 0] : vector<8x128xf32> -> vector<128x8xf32>
    %cst_33 = arith.constant dense<0.000000e+00> : vector<8x8xf32>
    %84 = tpu.matmul %82, %83, %cst_33 {dimension_numbers = #tpu.dot_dimension_numbers<[1], [0], [0], [1], [0, 0, 1, 1], [], []>} : vector<8x128xf32>, vector<128x8xf32>, vector<8x8xf32> -> vector<8x8xf32>
    %85 = vector.extract_strided_slice %1 {offsets = [6, 0], sizes = [1, 1], strides = [1, 1]} : vector<8x128xf32> to vector<1x1xf32>
    %86 = vector.broadcast %85 : vector<1x1xf32> to vector<8x8xf32>
    %87 = arith.addf %84, %86 : vector<8x8xf32>
    %88 = arith.negf %87 : vector<8x8xf32>
    %89 = math.exp %88 : vector<8x8xf32>
    %cst_34 = arith.constant 1.000000e+00 : f32
    %90 = vector.broadcast %cst_34 : f32 to vector<8x8xf32>
    %91 = arith.addf %90, %89 : vector<8x8xf32>
    %92 = arith.divf %90, %91 : vector<8x8xf32>
    %c0_35 = arith.constant 0 : index
    %c0_36 = arith.constant 0 : index
    %c0_37 = arith.constant 0 : index
    %93 = vector.load %arg3[%c0_35, %c0_36, %c0_37] : memref<1x8x8xf32, #tpu.memory_space<vmem>>, vector<1x8x8xf32>
    %94 = vector.shape_cast %93 : vector<1x8x8xf32> to vector<8x8xf32>
    %95 = vector.shape_cast %92 : vector<8x8xf32> to vector<1x8x8xf32>
    tpu.vector_store %arg3[%c0_35, %c0_36, %c0_37], %95 {strides = array<i32>} : memref<1x8x8xf32, #tpu.memory_space<vmem>>, vector<1x8x8xf32>,
    return
  }
  func.func @transform_0(%arg0: i32) -> (i32, i32) {
    %c0_i32 = arith.constant 0 : i32
    %c0_i32_0 = arith.constant 0 : i32
    return %arg0, %c0_i32 : i32, i32
  }
  func.func @transform_1(%arg0: i32) -> (i32, i32) {
    %c0_i32 = arith.constant 0 : i32
    %c0_i32_0 = arith.constant 0 : i32
    %c0_i32_1 = arith.constant 0 : i32
    return %c0_i32, %c0_i32_0 : i32, i32
  }
  func.func @transform_2(%arg0: i32) -> (i32, i32, i32) {
    %c0_i32 = arith.constant 0 : i32
    %c0_i32_0 = arith.constant 0 : i32
    %c0_i32_1 = arith.constant 0 : i32
    return %arg0, %c0_i32, %c0_i32_0 : i32, i32, i32
  }
}

</mosaic_0001>

<llo_original>
// kernel: tpu_custom_call.1
$region0: #{tpu_custom_call.1}
  #allocation0 [shape = 'u32[]', space=smem, size = 0x4, offset = 0x4, fixed_abs, tag = 'smem constant byte address 0x4 - core index']
  #allocation1 [shape = 'u32[72,128]{1,0:T(1,128)}', space=vmem, size = 0x9000, scoped, tag = 'internal scratch']
  %s0 = inlined_call_operand.hbm [shape: f32[8,64], index: 0, kind: input, shape index: {}]
  %s1 = inlined_call_operand.hbm [shape: f32[720,128], index: 1, kind: input, shape index: {}]
  %s2 = inlined_call_operand.hbm [shape: f32[1,8,8], index: 2, kind: output, shape index: {}]
  %s3 = sld [smem:[#allocation0]]
  $region26: #{tpu_custom_call.1} parent=0
    _
  %s5 = ssub.s32 1, %s3
  %s6 = scalar_select 0, %s5, %s3
  $region1: #{tpu_custom_call.1} parent=0
    #allocation2 [shape = 'u8[4096]{0}', space=vmem, size = 0x1000, scoped, tag = 'input window, operand 0, single buffered']
    #allocation3 [shape = 's32[1]{0}', space=sflag, size = 0x4, scoped, tag = 'scoped memory for tpu_custom_call.1']
    #allocation4 [shape = 's32[1]{0}', space=sflag, size = 0x4, scoped, tag = 'scoped memory for tpu_custom_call.1']
    #allocation5 [shape = 'u8[368640]{0}', space=vmem, size = 0x5a000, scoped, tag = 'input window, operand 1, single buffered']
    #allocation6 [shape = 's32[1]{0}', space=sflag, size = 0x4, scoped, tag = 'scoped memory for tpu_custom_call.1']
    #allocation7 [shape = 'u8[4096]{0}', space=vmem, size = 0x1000, scoped, tag = 'output window, operand 0, single buffered']
    %7 = vsyncpa [#allocation3], 0
    %8 = vsyncpa [#allocation6], 0
    %9 = vsyncpa [#allocation4], 0
    // Predicated region
    $region2: #{tpu_custom_call.1} parent=1 // pred_check
      _
    $region3: #{tpu_custom_call.1} parent=1 // pred_check_branch
      %11 = sbr.rel (0) target = $region5
    $region4: #{tpu_custom_call.1} parent=1 // pred_region
      %13 = vsyncadd [#allocation3], 0
      %s15 = sshll.u32 %s0, 4
      %s16 = int_to_ptr.hbm [resolvable:$true] %s15
      %s17 = sshll.u32 [#allocation2], 4
      %s18 = int_to_ptr.vmem [resolvable:$true] %s17
      %20 = dma.hbm_to_vmem [thread:$0]  %s16, 128, %s18, [#allocation3]
    $region5: #{tpu_custom_call.1} parent=1 // pred_fallthru
      _
    // Predicated region
    $region6: #{tpu_custom_call.1} parent=1 // pred_check
      _
    $region7: #{tpu_custom_call.1} parent=1 // pred_check_branch
      %22 = sbr.rel (0) target = $region9
    $region8: #{tpu_custom_call.1} parent=1 // pred_region
      %24 = vsyncadd [#allocation6], 0
      %s25 = sshll.u32 %s1, 4
      %s26 = int_to_ptr.hbm [resolvable:$true] %s25
      %s27 = sshll.u32 [#allocation5], 4
      %s28 = int_to_ptr.vmem [resolvable:$true] %s27
      %33 = dma.hbm_to_vmem [thread:$0]  %s26, 11520, %s28, [#allocation6], 128, 128, 8
    $region9: #{tpu_custom_call.1} parent=1 // pred_fallthru
      _
    // Predicated region
    $region10: #{tpu_custom_call.1} parent=1 // pred_check
      _
    $region11: #{tpu_custom_call.1} parent=1 // pred_check_branch
      %35 = sbr.rel (0) target = $region13
    $region12: #{tpu_custom_call.1} parent=1 // pred_region
      %37 = dma.done [#allocation3], 128
    $region13: #{tpu_custom_call.1} parent=1 // pred_fallthru
      _
    // Predicated region
    $region14: #{tpu_custom_call.1} parent=1 // pred_check
      _
    $region15: #{tpu_custom_call.1} parent=1 // pred_check_branch
      %39 = sbr.rel (0) target = $region17
    $region16: #{tpu_custom_call.1} parent=1 // pred_region
      %41 = dma.done [#allocation6], 11520
    $region17: #{tpu_custom_call.1} parent=1 // pred_fallthru
      _
    %v42 = vld [vmem:[#allocation2] sm:$0xff]
    %v43 = vld [vmem:[#allocation5 + $0x2c0] sm:$0xff]
    %v44 = vld [vmem:[#allocation5] sm:$0xff]
    %v45 = vld [vmem:[#allocation5 + $0x8] sm:$0xff]
    %v46 = vld [vmem:[#allocation5 + $0x10] sm:$0xff]
    %v47 = vld [vmem:[#allocation5 + $0x18] sm:$0xff]
    %v48 = vld [vmem:[#allocation5 + $0x20] sm:$0xff]
    %v49 = vld [vmem:[#allocation5 + $0x28] sm:$0xff]
    %v50 = vld [vmem:[#allocation5 + $0x30] sm:$0xff]
    %v51 = vld [vmem:[#allocation5 + $0x38] sm:$0xff]
    %v52 = vperm.slane %v43, 0
    %vm53 = vcmask 523264
    %v55 = vsel %vm53, %v42, 0
    %57 = vmatpush.msra.mxu0 0.0
    %58 = vmatpush.msra.mxu0 0.0
    %59 = vmatpush.msra.mxu0 0.0
    %60 = vmatpush.msra.mxu0 0.0
    %61 = vmatpush.msra.mxu0 0.0
    %62 = vmatpush.msra.mxu0 0.0
    %63 = vmatpush.msra.mxu0 0.0
    %64 = vmatpush.msra.mxu0 0.0
    %65 = vmatpush.msra.mxu0 %v51
    %66 = vmatpush.msra.mxu0 %v50
    %67 = vmatpush.msra.mxu0 %v49
    %68 = vmatpush.msra.mxu0 %v48
    %69 = vmatpush.msra.mxu0 %v47
    %70 = vmatpush.msra.mxu0 %v46
    %71 = vmatpush.msra.mxu0 %v45
    %72 = vmatpush.msra.mxu0 %v44
    %73 = vmatmul.f32.gmra.mxu0 %v55
    %v74 = vpop.f32.mrf.mxu0
    %v75 = vadd.f32 %v52, %v74
    %76 = vdwg.mxu0
    %v77 = vmul.f32 %v75, 0.5
    %v78 = vmul.f32 %v75, 0.70710677
    %v79 = vmul.f32 %v78, %v78
    %v80 = vmin.f32 16.0, %v79
    %v81 = vmul.f32 %v80, 2.1237322e-06
    %v82 = vadd.f32 %v81, 0.00028619796
    %v83 = vmul.f32 %v80, %v82
    %v84 = vadd.f32 %v83, 0.0036580483
    %v85 = vmul.f32 %v80, %v84
    %v86 = vadd.f32 %v85, 0.05243302
    %v87 = vmul.f32 %v80, %v86
    %v88 = vadd.f32 %v87, 0.18741608
    %v89 = vmul.f32 %v80, %v88
    %v90 = vadd.f32 %v89, 1.1283791
    %v91 = vmul.f32 %v78, %v90
    %v92 = vmul.f32 %v80, 3.8918573e-05
    %v93 = vadd.f32 %v92, 0.001143296
    %v94 = vmul.f32 %v80, %v93
    %v95 = vadd.f32 %v94, 0.014752088
    %v96 = vmul.f32 %v80, %v95
    %v97 = vadd.f32 %v96, 0.112945676
    %v98 = vmul.f32 %v80, %v97
    %v99 = vadd.f32 %v98, 0.4994258
    %v100 = vmul.f32 %v80, %v99
    %v101 = vadd.f32 %v100, 1.0
    %v102 = vrcp.pop %v101
    %v103 = vmul.f32 %v101, %v102
    %v104 = vsub.f32 1.0, %v103
    %v105 = vmul.f32 %v102, %v104
    %v106 = vadd.f32 %v102, %v105
    %vm107 = vweird.f32 %v101
    %vm108 = vweird.f32 %v102
    %vm109 = vmor %vm107, %vm108
    %v110 = vsel %vm109, %v102, %v106
    %v111 = vand.u32 2147483647, %v101
    %vm112 = vcmp.eq.f32.partialorder %v111, 8.507059e+37
    %v113 = vand.u32 %v101, 2147483648
    %v114 = vor.u32 1.1754944e-38, %v113
    %v115 = vsel %vm112, %v114, %v110
    %v116 = vmul.f32 %v91, %v115
    %v117 = vmin.f32 %v116, 1.0
    %v118 = vmax.f32 %v117, -1.0
    %v119 = vadd.f32 %v118, 1.0
    %v120 = vmul.f32 %v77, %v119
    %v121 = vld [vmem:[#allocation5 + $0x40] sm:$0xff]
    %v122 = vld [vmem:[#allocation5 + $0x48] sm:$0xff]
    %v123 = vld [vmem:[#allocation5 + $0x50] sm:$0xff]
    %v124 = vld [vmem:[#allocation5 + $0x58] sm:$0xff]
    %v125 = vld [vmem:[#allocation5 + $0x60] sm:$0xff]
    %v126 = vld [vmem:[#allocation5 + $0x68] sm:$0xff]
    %v127 = vld [vmem:[#allocation5 + $0x70] sm:$0xff]
    %v128 = vld [vmem:[#allocation5 + $0x78] sm:$0xff]
    %v129 = vld [vmem:[#allocation5 + $0x80] sm:$0xff]
    %v130 = vld [vmem:[#allocation5 + $0x88] sm:$0xff]
    %v131 = vld [vmem:[#allocation5 + $0x90] sm:$0xff]
    %v132 = vld [vmem:[#allocation5 + $0x98] sm:$0xff]
    %v133 = vld [vmem:[#allocation5 + $0xa0] sm:$0xff]
    %v134 = vld [vmem:[#allocation5 + $0xa8] sm:$0xff]
    %v135 = vld [vmem:[#allocation5 + $0xb0] sm:$0xff]
    %v136 = vld [vmem:[#allocation5 + $0xb8] sm:$0xff]
    %v137 = vperm.slane %v43, 1
    %138 = vmatpush.msra.mxu0 %v136
    %139 = vmatpush.msra.mxu0 %v135
    %140 = vmatpush.msra.mxu0 %v134
    %141 = vmatpush.msra.mxu0 %v133
    %142 = vmatpush.msra.mxu0 %v132
    %143 = vmatpush.msra.mxu0 %v131
    %144 = vmatpush.msra.mxu0 %v130
    %145 = vmatpush.msra.mxu0 %v129
    %146 = vmatpush.msra.mxu0 %v128
    %147 = vmatpush.msra.mxu0 %v127
    %148 = vmatpush.msra.mxu0 %v126
    %149 = vmatpush.msra.mxu0 %v125
    %150 = vmatpush.msra.mxu0 %v124
    %151 = vmatpush.msra.mxu0 %v123
    %152 = vmatpush.msra.mxu0 %v122
    %153 = vmatpush.msra.mxu0 %v121
    %154 = vmatmul.f32.gmra.mxu0 %v120
    %v155 = vpop.f32.mrf.mxu0
    %v156 = vadd.f32 %v137, %v155
    %157 = vdwg.mxu0
    %v158 = vmul.f32 %v156, 0.5
    %v159 = vmul.f32 %v156, 0.70710677
    %v160 = vmul.f32 %v159, %v159
    %v161 = vmin.f32 16.0, %v160
    %v162 = vmul.f32 %v161, 2.1237322e-06
    %v163 = vadd.f32 %v162, 0.00028619796
    %v164 = vmul.f32 %v161, %v163
    %v165 = vadd.f32 %v164, 0.0036580483
    %v166 = vmul.f32 %v161, %v165
    %v167 = vadd.f32 %v166, 0.05243302
    %v168 = vmul.f32 %v161, %v167
    %v169 = vadd.f32 %v168, 0.18741608
    %v170 = vmul.f32 %v161, %v169
    %v171 = vadd.f32 %v170, 1.1283791
    %v172 = vmul.f32 %v159, %v171
    %v173 = vmul.f32 %v161, 3.8918573e-05
    %v174 = vadd.f32 %v173, 0.001143296
    %v175 = vmul.f32 %v161, %v174
    %v176 = vadd.f32 %v175, 0.014752088
    %v177 = vmul.f32 %v161, %v176
    %v178 = vadd.f32 %v177, 0.112945676
    %v179 = vmul.f32 %v161, %v178
    %v180 = vadd.f32 %v179, 0.4994258
    %v181 = vmul.f32 %v161, %v180
    %v182 = vadd.f32 %v181, 1.0
    %v183 = vrcp.pop %v182
    %v184 = vmul.f32 %v182, %v183
    %v185 = vsub.f32 1.0, %v184
    %v186 = vmul.f32 %v183, %v185
    %v187 = vadd.f32 %v183, %v186
    %vm188 = vweird.f32 %v182
    %vm189 = vweird.f32 %v183
    %vm190 = vmor %vm188, %vm189
    %v191 = vsel %vm190, %v183, %v187
    %v192 = vand.u32 2147483647, %v182
    %vm193 = vcmp.eq.f32.partialorder %v192, 8.507059e+37
    %v194 = vand.u32 %v182, 2147483648
    %v195 = vor.u32 1.1754944e-38, %v194
    %v196 = vsel %vm193, %v195, %v191
    %v197 = vmul.f32 %v172, %v196
    %v198 = vmin.f32 %v197, 1.0
    %v199 = vmax.f32 %v198, -1.0
    %v200 = vadd.f32 %v199, 1.0
    %v201 = vmul.f32 %v158, %v200
    %v202 = vld [vmem:[#allocation5 + $0xc0] sm:$0xff]
    %v203 = vld [vmem:[#allocation5 + $0xc8] sm:$0xff]
    %v204 = vld [vmem:[#allocation5 + $0xd0] sm:$0xff]
    %v205 = vld [vmem:[#allocation5 + $0xd8] sm:$0xff]
    %v206 = vld [vmem:[#allocation5 + $0xe0] sm:$0xff]
    %v207 = vld [vmem:[#allocation5 + $0xe8] sm:$0xff]
    %v208 = vld [vmem:[#allocation5 + $0xf0] sm:$0xff]
    %v209 = vld [vmem:[#allocation5 + $0xf8] sm:$0xff]
    %v210 = vld [vmem:[#allocation5 + $0x100] sm:$0xff]
    %v211 = vld [vmem:[#allocation5 + $0x108] sm:$0xff]
    %v212 = vld [vmem:[#allocation5 + $0x110] sm:$0xff]
    %v213 = vld [vmem:[#allocation5 + $0x118] sm:$0xff]
    %v214 = vld [vmem:[#allocation5 + $0x120] sm:$0xff]
    %v215 = vld [vmem:[#allocation5 + $0x128] sm:$0xff]
    %v216 = vld [vmem:[#allocation5 + $0x130] sm:$0xff]
    %v217 = vld [vmem:[#allocation5 + $0x138] sm:$0xff]
    %v218 = vperm.slane %v43, 2
    %219 = vmatpush.msra.mxu0 %v217
    %220 = vmatpush.msra.mxu0 %v216
    %221 = vmatpush.msra.mxu0 %v215
    %222 = vmatpush.msra.mxu0 %v214
    %223 = vmatpush.msra.mxu0 %v213
    %224 = vmatpush.msra.mxu0 %v212
    %225 = vmatpush.msra.mxu0 %v211
    %226 = vmatpush.msra.mxu0 %v210
    %227 = vmatpush.msra.mxu0 %v209
    %228 = vmatpush.msra.mxu0 %v208
    %229 = vmatpush.msra.mxu0 %v207
    %230 = vmatpush.msra.mxu0 %v206
    %231 = vmatpush.msra.mxu0 %v205
    %232 = vmatpush.msra.mxu0 %v204
    %233 = vmatpush.msra.mxu0 %v203
    %234 = vmatpush.msra.mxu0 %v202
    %235 = vmatmul.f32.gmra.mxu0 %v201
    %v236 = vpop.f32.mrf.mxu0
    %v237 = vadd.f32 %v218, %v236
    %238 = vdwg.mxu0
    %v239 = vmul.f32 %v237, 0.5
    %v240 = vmul.f32 %v237, 0.70710677
    %v241 = vmul.f32 %v240, %v240
    %v242 = vmin.f32 16.0, %v241
    %v243 = vmul.f32 %v242, 2.1237322e-06
    %v244 = vadd.f32 %v243, 0.00028619796
    %v245 = vmul.f32 %v242, %v244
    %v246 = vadd.f32 %v245, 0.0036580483
    %v247 = vmul.f32 %v242, %v246
    %v248 = vadd.f32 %v247, 0.05243302
    %v249 = vmul.f32 %v242, %v248
    %v250 = vadd.f32 %v249, 0.18741608
    %v251 = vmul.f32 %v242, %v250
    %v252 = vadd.f32 %v251, 1.1283791
    %v253 = vmul.f32 %v240, %v252
    %v254 = vmul.f32 %v242, 3.8918573e-05
    %v255 = vadd.f32 %v254, 0.001143296
    %v256 = vmul.f32 %v242, %v255
    %v257 = vadd.f32 %v256, 0.014752088
    %v258 = vmul.f32 %v242, %v257
    %v259 = vadd.f32 %v258, 0.112945676
    %v260 = vmul.f32 %v242, %v259
    %v261 = vadd.f32 %v260, 0.4994258
    %v262 = vmul.f32 %v242, %v261
    %v263 = vadd.f32 %v262, 1.0
    %v264 = vrcp.pop %v263
    %v265 = vmul.f32 %v263, %v264
    %v266 = vsub.f32 1.0, %v265
    %v267 = vmul.f32 %v264, %v266
    %v268 = vadd.f32 %v264, %v267
    %vm269 = vweird.f32 %v263
    %vm270 = vweird.f32 %v264
    %vm271 = vmor %vm269, %vm270
    %v272 = vsel %vm271, %v264, %v268
    %v273 = vand.u32 2147483647, %v263
    %vm274 = vcmp.eq.f32.partialorder %v273, 8.507059e+37
    %v275 = vand.u32 %v263, 2147483648
    %v276 = vor.u32 1.1754944e-38, %v275
    %v277 = vsel %vm274, %v276, %v272
    %v278 = vmul.f32 %v253, %v277
    %v279 = vmin.f32 %v278, 1.0
    %v280 = vmax.f32 %v279, -1.0
    %v281 = vadd.f32 %v280, 1.0
    %v282 = vmul.f32 %v239, %v281
    %v283 = vadd.f32 %v282, %v120
    %v284 = vld [vmem:[#allocation5 + $0x140] sm:$0xff]
    %v285 = vld [vmem:[#allocation5 + $0x148] sm:$0xff]
    %v286 = vld [vmem:[#allocation5 + $0x150] sm:$0xff]
    %v287 = vld [vmem:[#allocation5 + $0x158] sm:$0xff]
    %v288 = vld [vmem:[#allocation5 + $0x160] sm:$0xff]
    %v289 = vld [vmem:[#allocation5 + $0x168] sm:$0xff]
    %v290 = vld [vmem:[#allocation5 + $0x170] sm:$0xff]
    %v291 = vld [vmem:[#allocation5 + $0x178] sm:$0xff]
    %v292 = vld [vmem:[#allocation5 + $0x180] sm:$0xff]
    %v293 = vld [vmem:[#allocation5 + $0x188] sm:$0xff]
    %v294 = vld [vmem:[#allocation5 + $0x190] sm:$0xff]
    %v295 = vld [vmem:[#allocation5 + $0x198] sm:$0xff]
    %v296 = vld [vmem:[#allocation5 + $0x1a0] sm:$0xff]
    %v297 = vld [vmem:[#allocation5 + $0x1a8] sm:$0xff]
    %v298 = vld [vmem:[#allocation5 + $0x1b0] sm:$0xff]
    %v299 = vld [vmem:[#allocation5 + $0x1b8] sm:$0xff]
    %v300 = vperm.slane %v43, 3
    %301 = vmatpush.msra.mxu0 %v299
    %302 = vmatpush.msra.mxu0 %v298
    %303 = vmatpush.msra.mxu0 %v297
    %304 = vmatpush.msra.mxu0 %v296
    %305 = vmatpush.msra.mxu0 %v295
    %306 = vmatpush.msra.mxu0 %v294
    %307 = vmatpush.msra.mxu0 %v293
    %308 = vmatpush.msra.mxu0 %v292
    %309 = vmatpush.msra.mxu0 %v291
    %310 = vmatpush.msra.mxu0 %v290
    %311 = vmatpush.msra.mxu0 %v289
    %312 = vmatpush.msra.mxu0 %v288
    %313 = vmatpush.msra.mxu0 %v287
    %314 = vmatpush.msra.mxu0 %v286
    %315 = vmatpush.msra.mxu0 %v285
    %316 = vmatpush.msra.mxu0 %v284
    %317 = vmatmul.f32.gmra.mxu0 %v283
    %v318 = vpop.f32.mrf.mxu0
    %v319 = vadd.f32 %v300, %v318
    %320 = vdwg.mxu0
    %v321 = vmul.f32 %v319, 0.5
    %v322 = vmul.f32 %v319, 0.70710677
    %v323 = vmul.f32 %v322, %v322
    %v324 = vmin.f32 16.0, %v323
    %v325 = vmul.f32 %v324, 2.1237322e-06
    %v326 = vadd.f32 %v325, 0.00028619796
    %v327 = vmul.f32 %v324, %v326
    %v328 = vadd.f32 %v327, 0.0036580483
    %v329 = vmul.f32 %v324, %v328
    %v330 = vadd.f32 %v329, 0.05243302
    %v331 = vmul.f32 %v324, %v330
    %v332 = vadd.f32 %v331, 0.18741608
    %v333 = vmul.f32 %v324, %v332
    %v334 = vadd.f32 %v333, 1.1283791
    %v335 = vmul.f32 %v322, %v334
    %v336 = vmul.f32 %v324, 3.8918573e-05
    %v337 = vadd.f32 %v336, 0.001143296
    %v338 = vmul.f32 %v324, %v337
    %v339 = vadd.f32 %v338, 0.014752088
    %v340 = vmul.f32 %v324, %v339
    %v341 = vadd.f32 %v340, 0.112945676
    %v342 = vmul.f32 %v324, %v341
    %v343 = vadd.f32 %v342, 0.4994258
    %v344 = vmul.f32 %v324, %v343
    %v345 = vadd.f32 %v344, 1.0
    %v346 = vrcp.pop %v345
    %v347 = vmul.f32 %v345, %v346
    %v348 = vsub.f32 1.0, %v347
    %v349 = vmul.f32 %v346, %v348
    %v350 = vadd.f32 %v346, %v349
    %vm351 = vweird.f32 %v345
    %vm352 = vweird.f32 %v346
    %vm353 = vmor %vm351, %vm352
    %v354 = vsel %vm353, %v346, %v350
    %v355 = vand.u32 2147483647, %v345
    %vm356 = vcmp.eq.f32.partialorder %v355, 8.507059e+37
    %v357 = vand.u32 %v345, 2147483648
    %v358 = vor.u32 1.1754944e-38, %v357
    %v359 = vsel %vm356, %v358, %v354
    %v360 = vmul.f32 %v335, %v359
    %v361 = vmin.f32 %v360, 1.0
    %v362 = vmax.f32 %v361, -1.0
    %v363 = vadd.f32 %v362, 1.0
    %v364 = vmul.f32 %v321, %v363
    %v365 = vld [vmem:[#allocation5 + $0x1c0] sm:$0xff]
    %v366 = vld [vmem:[#allocation5 + $0x1c8] sm:$0xff]
    %v367 = vld [vmem:[#allocation5 + $0x1d0] sm:$0xff]
    %v368 = vld [vmem:[#allocation5 + $0x1d8] sm:$0xff]
    %v369 = vld [vmem:[#allocation5 + $0x1e0] sm:$0xff]
    %v370 = vld [vmem:[#allocation5 + $0x1e8] sm:$0xff]
    %v371 = vld [vmem:[#allocation5 + $0x1f0] sm:$0xff]
    %v372 = vld [vmem:[#allocation5 + $0x1f8] sm:$0xff]
    %v373 = vld [vmem:[#allocation5 + $0x200] sm:$0xff]
    %v374 = vld [vmem:[#allocation5 + $0x208] sm:$0xff]
    %v375 = vld [vmem:[#allocation5 + $0x210] sm:$0xff]
    %v376 = vld [vmem:[#allocation5 + $0x218] sm:$0xff]
    %v377 = vld [vmem:[#allocation5 + $0x220] sm:$0xff]
    %v378 = vld [vmem:[#allocation5 + $0x228] sm:$0xff]
    %v379 = vld [vmem:[#allocation5 + $0x230] sm:$0xff]
    %v380 = vld [vmem:[#allocation5 + $0x238] sm:$0xff]
    %v381 = vperm.slane %v43, 4
    %382 = vmatpush.msra.mxu0 %v380
    %383 = vmatpush.msra.mxu0 %v379
    %384 = vmatpush.msra.mxu0 %v378
    %385 = vmatpush.msra.mxu0 %v377
    %386 = vmatpush.msra.mxu0 %v376
    %387 = vmatpush.msra.mxu0 %v375
    %388 = vmatpush.msra.mxu0 %v374
    %389 = vmatpush.msra.mxu0 %v373
    %390 = vmatpush.msra.mxu0 %v372
    %391 = vmatpush.msra.mxu0 %v371
    %392 = vmatpush.msra.mxu0 %v370
    %393 = vmatpush.msra.mxu0 %v369
    %394 = vmatpush.msra.mxu0 %v368
    %395 = vmatpush.msra.mxu0 %v367
    %396 = vmatpush.msra.mxu0 %v366
    %397 = vmatpush.msra.mxu0 %v365
    %398 = vmatmul.f32.gmra.mxu0 %v364
    %v399 = vpop.f32.mrf.mxu0
    %v400 = vadd.f32 %v381, %v399
    %401 = vdwg.mxu0
    %v402 = vmul.f32 %v400, 0.5
    %v403 = vmul.f32 %v400, 0.70710677
    %v404 = vmul.f32 %v403, %v403
    %v405 = vmin.f32 16.0, %v404
    %v406 = vmul.f32 %v405, 2.1237322e-06
    %v407 = vadd.f32 %v406, 0.00028619796
    %v408 = vmul.f32 %v405, %v407
    %v409 = vadd.f32 %v408, 0.0036580483
    %v410 = vmul.f32 %v405, %v409
    %v411 = vadd.f32 %v410, 0.05243302
    %v412 = vmul.f32 %v405, %v411
    %v413 = vadd.f32 %v412, 0.18741608
    %v414 = vmul.f32 %v405, %v413
    %v415 = vadd.f32 %v414, 1.1283791
    %v416 = vmul.f32 %v403, %v415
    %v417 = vmul.f32 %v405, 3.8918573e-05
    %v418 = vadd.f32 %v417, 0.001143296
    %v419 = vmul.f32 %v405, %v418
    %v420 = vadd.f32 %v419, 0.014752088
    %v421 = vmul.f32 %v405, %v420
    %v422 = vadd.f32 %v421, 0.112945676
    %v423 = vmul.f32 %v405, %v422
    %v424 = vadd.f32 %v423, 0.4994258
    %v425 = vmul.f32 %v405, %v424
    %v426 = vadd.f32 %v425, 1.0
    %v427 = vrcp.pop %v426
    %v428 = vmul.f32 %v426, %v427
    %v429 = vsub.f32 1.0, %v428
    %v430 = vmul.f32 %v427, %v429
    %v431 = vadd.f32 %v427, %v430
    %vm432 = vweird.f32 %v426
    %vm433 = vweird.f32 %v427
    %vm434 = vmor %vm432, %vm433
    %v435 = vsel %vm434, %v427, %v431
    %v436 = vand.u32 2147483647, %v426
    %vm437 = vcmp.eq.f32.partialorder %v436, 8.507059e+37
    %v438 = vand.u32 %v426, 2147483648
    %v439 = vor.u32 1.1754944e-38, %v438
    %v440 = vsel %vm437, %v439, %v435
    %v441 = vmul.f32 %v416, %v440
    %v442 = vmin.f32 %v441, 1.0
    %v443 = vmax.f32 %v442, -1.0
    %v444 = vadd.f32 %v443, 1.0
    %v445 = vmul.f32 %v402, %v444
    %v446 = vadd.f32 %v445, %v319
    %v447 = vld [vmem:[#allocation5 + $0x240] sm:$0xff]
    %v448 = vld [vmem:[#allocation5 + $0x248] sm:$0xff]
    %v449 = vld [vmem:[#allocation5 + $0x250] sm:$0xff]
    %v450 = vld [vmem:[#allocation5 + $0x258] sm:$0xff]
    %v451 = vld [vmem:[#allocation5 + $0x260] sm:$0xff]
    %v452 = vld [vmem:[#allocation5 + $0x268] sm:$0xff]
    %v453 = vld [vmem:[#allocation5 + $0x270] sm:$0xff]
    %v454 = vld [vmem:[#allocation5 + $0x278] sm:$0xff]
    %v455 = vld [vmem:[#allocation5 + $0x280] sm:$0xff]
    %v456 = vld [vmem:[#allocation5 + $0x288] sm:$0xff]
    %v457 = vld [vmem:[#allocation5 + $0x290] sm:$0xff]
    %v458 = vld [vmem:[#allocation5 + $0x298] sm:$0xff]
    %v459 = vld [vmem:[#allocation5 + $0x2a0] sm:$0xff]
    %v460 = vld [vmem:[#allocation5 + $0x2a8] sm:$0xff]
    %v461 = vld [vmem:[#allocation5 + $0x2b0] sm:$0xff]
    %v462 = vld [vmem:[#allocation5 + $0x2b8] sm:$0xff]
    %v463 = vperm.slane %v43, 5
    %464 = vmatpush.msra.mxu0 %v462
    %465 = vmatpush.msra.mxu0 %v461
    %466 = vmatpush.msra.mxu0 %v460
    %467 = vmatpush.msra.mxu0 %v459
    %468 = vmatpush.msra.mxu0 %v458
    %469 = vmatpush.msra.mxu0 %v457
    %470 = vmatpush.msra.mxu0 %v456
    %471 = vmatpush.msra.mxu0 %v455
    %472 = vmatpush.msra.mxu0 %v454
    %473 = vmatpush.msra.mxu0 %v453
    %474 = vmatpush.msra.mxu0 %v452
    %475 = vmatpush.msra.mxu0 %v451
    %476 = vmatpush.msra.mxu0 %v450
    %477 = vmatpush.msra.mxu0 %v449
    %478 = vmatpush.msra.mxu0 %v448
    %479 = vmatpush.msra.mxu0 %v447
    %480 = vmatmul.f32.gmra.mxu0 %v446
    %v481 = vpop.f32.mrf.mxu0
    %v482 = vadd.f32 %v463, %v481
    %483 = vdwg.mxu0
    %v484 = vmul.f32 %v482, 0.5
    %v485 = vmul.f32 %v482, 0.70710677
    %v486 = vmul.f32 %v485, %v485
    %v487 = vmin.f32 16.0, %v486
    %v488 = vmul.f32 %v487, 2.1237322e-06
    %v489 = vadd.f32 %v488, 0.00028619796
    %v490 = vmul.f32 %v487, %v489
    %v491 = vadd.f32 %v490, 0.0036580483
    %v492 = vmul.f32 %v487, %v491
    %v493 = vadd.f32 %v492, 0.05243302
    %v494 = vmul.f32 %v487, %v493
    %v495 = vadd.f32 %v494, 0.18741608
    %v496 = vmul.f32 %v487, %v495
    %v497 = vadd.f32 %v496, 1.1283791
    %v498 = vmul.f32 %v485, %v497
    %v499 = vmul.f32 %v487, 3.8918573e-05
    %v500 = vadd.f32 %v499, 0.001143296
    %v501 = vmul.f32 %v487, %v500
    %v502 = vadd.f32 %v501, 0.014752088
    %v503 = vmul.f32 %v487, %v502
    %v504 = vadd.f32 %v503, 0.112945676
    %v505 = vmul.f32 %v487, %v504
    %v506 = vadd.f32 %v505, 0.4994258
    %v507 = vmul.f32 %v487, %v506
    %v508 = vadd.f32 %v507, 1.0
    %v509 = vrcp.pop %v508
    %v510 = vmul.f32 %v508, %v509
    %v511 = vsub.f32 1.0, %v510
    %v512 = vmul.f32 %v509, %v511
    %v513 = vadd.f32 %v509, %v512
    %vm514 = vweird.f32 %v508
    %vm515 = vweird.f32 %v509
    %vm516 = vmor %vm514, %vm515
    %v517 = vsel %vm516, %v509, %v513
    %v518 = vand.u32 2147483647, %v508
    %vm519 = vcmp.eq.f32.partialorder %v518, 8.507059e+37
    %v520 = vand.u32 %v508, 2147483648
    %v521 = vor.u32 1.1754944e-38, %v520
    %v522 = vsel %vm519, %v521, %v517
    %v523 = vmul.f32 %v498, %v522
    %v524 = vmin.f32 %v523, 1.0
    %v525 = vmax.f32 %v524, -1.0
    %v526 = vadd.f32 %v525, 1.0
    %v527 = vmul.f32 %v484, %v526
    %v528 = vld [vmem:[#allocation5 + $0x2c8] sm:$0xff]
    %v530 = vrot.slane %v43, 6
    %s531 = vtos %v530
    %v532 = vstv %s531
    %534 = vmatpush.xpose.msra.mxu0 0.0
    %535 = vmatpush.xpose.msra.mxu0 0.0
    %536 = vmatpush.xpose.msra.mxu0 0.0
    %537 = vmatpush.xpose.msra.mxu0 0.0
    %538 = vmatpush.xpose.msra.mxu0 0.0
    %539 = vmatpush.xpose.msra.mxu0 0.0
    %540 = vmatpush.xpose.msra.mxu0 0.0
    %541 = vmatpush.xpose.msra.mxu0 0.0
    %542 = vmatpush.xpose.msra.mxu0 0.0
    %543 = vmatpush.xpose.msra.mxu0 0.0
    %544 = vmatpush.xpose.msra.mxu0 0.0
    %545 = vmatpush.xpose.msra.mxu0 0.0
    %546 = vmatpush.xpose.msra.mxu0 0.0
    %547 = vmatpush.xpose.msra.mxu0 0.0
    %548 = vmatpush.xpose.msra.mxu0 0.0
    %549 = vmatpush.xpose.msra.mxu0 %v527
    %550 = vmatmul.f32.gmra.mxu0 %v528
    %v551 = vpop.f32.mrf.mxu0
    %v552 = vadd.f32 %v532, %v551
    %553 = vdwg.mxu0
    %v554 = vxor.u32 %v552, 2147483648
    %v555 = vmul.f32 %v554, 1.442695
    %v556 = vpow.pop %v555
    %v557 = vadd.f32 %v556, 1.0
    %v558 = vrcp.pop %v557
    %v559 = vmul.f32 %v557, %v558
    %v560 = vsub.f32 1.0, %v559
    %v561 = vmul.f32 %v558, %v560
    %v562 = vadd.f32 %v558, %v561
    %vm563 = vweird.f32 %v557
    %vm564 = vweird.f32 %v558
    %vm565 = vmor %vm563, %vm564
    %v566 = vsel %vm565, %v558, %v562
    %v567 = vand.u32 2147483647, %v557
    %vm568 = vcmp.eq.f32.partialorder %v567, 8.507059e+37
    %v569 = vand.u32 %v557, 2147483648
    %v570 = vor.u32 1.1754944e-38, %v569
    %v571 = vsel %vm568, %v570, %v566
    %v572 = vmul.f32 1.0, %v571
    %vm573 = vcmask 64512
    %574 = vst.msk [vmem:[#allocation7] sm:$0xff] %vm573, %v572
    // Predicated region
    $region18: #{tpu_custom_call.1} parent=1 // pred_check
      _
    $region19: #{tpu_custom_call.1} parent=1 // pred_check_branch
      %576 = sbr.rel (0) target = $region21
    $region20: #{tpu_custom_call.1} parent=1 // pred_region
      %578 = vsyncadd [#allocation4], 0
      %s580 = sshll.u32 [#allocation7], 4
      %s581 = int_to_ptr.vmem [resolvable:$true] %s580
      %s582 = sshll.u32 %s2, 4
      %s583 = int_to_ptr.hbm [resolvable:$true] %s582
      %585 = dma.vmem_to_hbm [thread:$0]  %s581, 128, %s583, [#allocation4]
    $region21: #{tpu_custom_call.1} parent=1 // pred_fallthru
      _
    // Predicated region
    $region22: #{tpu_custom_call.1} parent=1 // pred_check
      _
    $region23: #{tpu_custom_call.1} parent=1 // pred_check_branch
      %587 = sbr.rel (0) target = $region25
    $region24: #{tpu_custom_call.1} parent=1 // pred_region
      %589 = dma.done [#allocation4], 128
    $region25: #{tpu_custom_call.1} parent=1 // pred_fallthru
      _
    %590 = vsyncpa [#allocation3], 1
    %591 = vsyncpa [#allocation6], 1
    %592 = vsyncpa [#allocation4], 1

</llo_original>
